<compile_context>
chip_gen: v7x
topology: tpu7x:2x2x1
jax: 0.10.0
libtpu: 0.0.40
codegen_flags: <defaults>
</compile_context>

<pallas_src>
import functools

import jax
import jax.numpy as jnp
from jax import lax
from jax.experimental import pallas as pl
from jax.experimental.pallas import tpu as pltpu


def _cdiv(a, b):
    return (a + b - 1) // b


def _round_up(n, m):
    return ((n + m - 1) // m) * m


# ----------------------------- kernels --------------------------------------


def _gram_partial_kernel(f_ref, g_ref, *, tk, hw, nk_per_split, need_mask):
    """Accumulate one split's partial Gram: g (+)= F_tile @ F_tile^T (f32)."""
    k = pl.program_id(1)

    f = f_ref[...]
    if need_mask:
        # Zero columns past the true hw (ragged last tile) and the entirety of
        # clamped duplicate tiles (their *intended* offset is >= hw), so
        # unspecified out-of-bounds data never reaches the MXU.
        col0 = (pl.program_id(0) * nk_per_split + k) * tk
        col = col0 + lax.broadcasted_iota(jnp.int32, f.shape, 1)
        f = jnp.where(col < hw, f, jnp.zeros_like(f))

    # A @ A^T expressed by contracting the LAST dims of both operands: no
    # explicit transpose of the (bc, tk) tile is materialized (the transposed
    # operand is handled in the MXU feed).  Fallback if a per-step vxpose ever
    # shows up in the MLIR: pl.dot(f, f, trans_b=True).
    partial = lax.dot_general(
        f, f,
        dimension_numbers=(((1,), (1,)), ((), ())),
        preferred_element_type=jnp.float32,
    )

    @pl.when(k == 0)
    def _():
        g_ref[...] = partial          # direct write: no zero-init + re-read

    @pl.when(k != 0)
    def _():
        g_ref[...] += partial


def _finalize_style_kernel(p_ref, gt_ref, g_ref, loss_ref, *, inv_norm,
                           inv_nsq):
    """Combine split-K partials, normalize, compute MSE vs. the target gram."""
    g = jnp.sum(p_ref[...], axis=0) * inv_norm
    g_ref[...] = g
    diff = g - gt_ref[...]
    # Mean over the true bc*bc entries (no padding anywhere in G).
    loss_ref[0, 0] = jnp.sum(diff * diff) * inv_nsq


# ----------------------------- wrappers --------------------------------------


def _features(x, compute_dtype):
    """NCHW -> (bc, hw) view; cast only if a different compute dtype is asked."""
    b, c, h, w = x.shape
    bc, hw = b * c, h * w
    f = x.reshape(bc, hw)
    if f.dtype != compute_dtype:
        f = f.astype(compute_dtype)
    return f, bc, hw, float(b * c * h * w)


def _choose_tiles(bc, hw, itemsize, tk_max, nsplit):
    """Balanced K tiles sized from a VMEM budget; split count clamped to nk."""
    if tk_max is None:
        budget = 16 * 1024 * 1024                 # double-buffered F-tile budget
        rows = _round_up(max(bc, 1), 16)          # sublane-padded row estimate
        tk_max = budget // (2 * rows * itemsize)
    tk_max = max(128, (tk_max // 128) * 128)

    nk = _cdiv(hw, tk_max)
    if nk == 1:
        tk = hw                                   # full-dim block: no padding
    else:
        tk = _round_up(_cdiv(hw, nk), 128)        # balanced tiles, <128 pad each
        nk = _cdiv(hw, tk)
        if nk == 1:
            tk = hw
    nsplit = max(1, min(int(nsplit), nk))
    return tk, nk, nsplit


def _partial_gram(f, bc, hw, *, tk, nk, nsplit):
    """Tiled, split-K Gram partials -> (nsplit, bc, bc) float32."""
    itemsize = jnp.dtype(f.dtype).itemsize
    nk_per_split = _cdiv(nk, nsplit)
    need_mask = (nsplit * nk_per_split * tk) > hw

    def f_index(s, k):
        # Clamp so the block start always lies inside the array; clamped
        # duplicate tiles are fully zeroed in-kernel (their cols are >= hw).
        return (0, jnp.minimum(s * nk_per_split + k, nk - 1))

    # VMEM: double-buffered F tile + G accumulator block (+ headroom).
    rows = _round_up(bc, 16)
    g_bytes = 2 * _round_up(bc, 8) * _round_up(bc, 128) * 4
    vmem_limit = int(max(2 * rows * tk * itemsize + g_bytes + (2 << 20),
                         8 << 20))

    return pl.pallas_call(
        functools.partial(
            _gram_partial_kernel,
            tk=tk, hw=hw, nk_per_split=nk_per_split, need_mask=need_mask),
        out_shape=jax.ShapeDtypeStruct((nsplit, bc, bc), jnp.float32),
        grid=(nsplit, nk_per_split),
        in_specs=[pl.BlockSpec((bc, tk), f_index)],
        out_specs=pl.BlockSpec((None, bc, bc), lambda s, k: (s, 0, 0)),
        compiler_params=pltpu.CompilerParams(
            dimension_semantics=("parallel", "arbitrary"),
            vmem_limit_bytes=vmem_limit),
    )(f)


@functools.partial(jax.jit,
                   static_argnames=("compute_dtype", "tk_max", "nsplit"))
def gram_matrix(x, *, compute_dtype=jnp.float32, tk_max=None, nsplit=2):
    """G = (F @ F.T) / (b*c*h*w), F = x.reshape(b*c, h*w)."""
    f, bc, hw, norm = _features(x, compute_dtype)
    tk, nk, nsplit = _choose_tiles(bc, hw, jnp.dtype(compute_dtype).itemsize,
                                   tk_max, nsplit)
    partials = _partial_gram(f, bc, hw, tk=tk, nk=nk, nsplit=nsplit)
    return jnp.sum(partials, axis=0) * (1.0 / norm)       # tiny (bc, bc) epilogue


@functools.partial(jax.jit,
                   static_argnames=("compute_dtype", "tk_max", "nsplit"))
def style_loss_forward(x, target_gram, *, compute_dtype=jnp.float32,
                       tk_max=None, nsplit=2):
    """StyleLoss.forward: returns (input unchanged, mse_loss, gram(input))."""
    f, bc, hw, norm = _features(x, compute_dtype)
    tk, nk, nsplit = _choose_tiles(bc, hw, jnp.dtype(compute_dtype).itemsize,
                                   tk_max, nsplit)
    partials = _partial_gram(f, bc, hw, tk=tk, nk=nk, nsplit=nsplit)

    g, loss = pl.pallas_call(
        functools.partial(
            _finalize_style_kernel,
            inv_norm=1.0 / norm,
            inv_nsq=1.0 / float(bc * bc)),
        out_shape=(jax.ShapeDtypeStruct((bc, bc), jnp.float32),
                   jax.ShapeDtypeStruct((1, 1), jnp.float32)),
        in_specs=[pl.BlockSpec(memory_space=pltpu.MemorySpace.VMEM),
                  pl.BlockSpec(memory_space=pltpu.MemorySpace.VMEM)],
        out_specs=(pl.BlockSpec(memory_space=pltpu.MemorySpace.VMEM),
                   pl.BlockSpec(memory_space=pltpu.MemorySpace.SMEM)),
    )(partials, target_gram.astype(jnp.float32))

    # forward() returns the input unchanged (loss carried as a value).
    return x, loss[0, 0], g


# ----------------------------- reference -------------------------------------


def _gram_ref(x):
    b, c, h, w = x.shape
    f = x.reshape(b * c, h * w).astype(jnp.float32)
    return (f @ f.T) / (b * c * h * w)


# ----------------------------- main -------------------------------------------

if __name__ == "__main__":
    key = jax.random.PRNGKey(0)
    k_tgt, k_in = jax.random.split(key)

    B, C, H, W = 2, 4, 16, 16  # NCHW, like the PyTorch module
    target_feature = jax.random.normal(k_tgt, (B, C, H, W), dtype=jnp.float32)
    x = jax.random.normal(k_in, (B, C, H, W), dtype=jnp.float32)

    # __init__: target gram (detached constant), same tiled kernel
    target_G = jax.block_until_ready(gram_matrix(target_feature))

    # forward
    out, loss, G = jax.block_until_ready(style_loss_forward(x, target_G))

    # sanity checks vs pure-JAX reference (f32 path, strict tolerance)
    ref_tG = _gram_ref(target_feature)
    ref_G = _gram_ref(x)
    ref_loss = jnp.mean((ref_G - ref_tG) ** 2)
    assert jnp.allclose(target_G, ref_tG, atol=1e-5, rtol=1e-5)
    assert jnp.allclose(G, ref_G, atol=1e-5, rtol=1e-5)
    assert jnp.allclose(loss, ref_loss, atol=1e-5, rtol=1e-5)
    assert jnp.array_equal(out, x)  # forward returns input unchanged

    # Exercise the multi-tile + split-K + ragged-tail (clamp/mask) paths with a
    # forced small K tile and a non-multiple-of-128 hw.
    shp2 = (2, 4, 16, 17)  # bc=8, hw=272 -> 3 K tiles of 128, 2-way split-K
    tf2 = jax.random.normal(jax.random.PRNGKey(1), shp2, dtype=jnp.float32)
    x2 = jax.random.normal(jax.random.PRNGKey(2), shp2, dtype=jnp.float32)
    tG2 = gram_matrix(tf2, tk_max=128, nsplit=2)
    out2, loss2, G2 = style_loss_forward(x2, tG2, tk_max=128, nsplit=2)
    jax.block_until_ready((tG2, out2, loss2, G2))
    ref_tG2, ref_G2 = _gram_ref(tf2), _gram_ref(x2)
    assert jnp.allclose(tG2, ref_tG2, atol=1e-5, rtol=1e-5)
    assert jnp.allclose(G2, ref_G2, atol=1e-5, rtol=1e-5)
    assert jnp.allclose(loss2, jnp.mean((ref_G2 - ref_tG2) ** 2),
                        atol=1e-5, rtol=1e-5)

    # bf16 compute path (half the HBM read of F, native MXU path); f32 accum.
    _, loss_bf16, G_bf16 = jax.block_until_ready(
        style_loss_forward(x, target_G, compute_dtype=jnp.bfloat16))
    assert jnp.allclose(G_bf16, ref_G, atol=2e-2, rtol=2e-2)

    print("KERNEL_OK")
</pallas_src>

<mosaic_0001>
module attributes {stable_mosaic.version = 11 : i64} {
  func.func @_gram_partial_kernel(%arg0: i32, %arg1: i32, %arg2: memref<8x256xf32, #tpu.memory_space<vmem>>, %arg3: memref<1x8x8xf32, #tpu.memory_space<vmem>>) attributes {dimension_semantics = [#tpu.dimension_semantics<parallel>, #tpu.dimension_semantics<arbitrary>], iteration_bounds = array<i64: 1, 1>, scalar_prefetch = 0 : i64, scratch_operands = 0 : i64, tpu.core_type = #tpu.core_type<tc>, window_params = [{transform_indices = @transform_0, window_bounds = array<i64: 8, 256>}, {transform_indices = @transform_1, window_bounds = array<i64: 1, 8, 8>}]} {
    %c0 = arith.constant 0 : index
    %c0_0 = arith.constant 0 : index
    %0 = vector.load %arg2[%c0, %c0_0] : memref<8x256xf32, #tpu.memory_space<vmem>>, vector<8x256xf32>
    %cst = arith.constant dense<0.000000e+00> : vector<8x8xf32>
    %1 = tpu.matmul %0, %0, %cst {dimension_numbers = #tpu.dot_dimension_numbers<[1], [1], [0], [0], [0, 0, 1, 0], [], []>} : vector<8x256xf32>, vector<8x256xf32>, vector<8x8xf32> -> vector<8x8xf32>
    %c0_i32 = arith.constant 0 : i32
    %2 = arith.cmpi eq, %arg1, %c0_i32 : i32
    %3 = arith.extui %2 : i1 to i32
    %c0_i32_1 = arith.constant 0 : i32
    %4 = arith.cmpi ne, %3, %c0_i32_1 : i32
    scf.if %4 {
      %c0_4 = arith.constant 0 : index
      %c0_5 = arith.constant 0 : index
      %c0_6 = arith.constant 0 : index
      %8 = vector.load %arg3[%c0_4, %c0_5, %c0_6] : memref<1x8x8xf32, #tpu.memory_space<vmem>>, vector<1x8x8xf32>
      %9 = vector.shape_cast %8 : vector<1x8x8xf32> to vector<8x8xf32>
      %10 = vector.shape_cast %1 : vector<8x8xf32> to vector<1x8x8xf32>
      tpu.vector_store %arg3[%c0_4, %c0_5, %c0_6], %10 {strides = array<i32>} : memref<1x8x8xf32, #tpu.memory_space<vmem>>, vector<1x8x8xf32>,
    } else {
    }
    %c0_i32_2 = arith.constant 0 : i32
    %5 = arith.cmpi ne, %arg1, %c0_i32_2 : i32
    %6 = arith.extui %5 : i1 to i32
    %c0_i32_3 = arith.constant 0 : i32
    %7 = arith.cmpi ne, %6, %c0_i32_3 : i32
    scf.if %7 {
      %c0_4 = arith.constant 0 : index
      %c0_5 = arith.constant 0 : index
      %c0_6 = arith.constant 0 : index
      %8 = vector.load %arg3[%c0_4, %c0_5, %c0_6] : memref<1x8x8xf32, #tpu.memory_space<vmem>>, vector<1x8x8xf32>
      %9 = vector.shape_cast %8 : vector<1x8x8xf32> to vector<8x8xf32>
      %10 = arith.addf %9, %1 : vector<8x8xf32>
      %c0_7 = arith.constant 0 : index
      %c0_8 = arith.constant 0 : index
      %c0_9 = arith.constant 0 : index
      %11 = vector.load %arg3[%c0_7, %c0_8, %c0_9] : memref<1x8x8xf32, #tpu.memory_space<vmem>>, vector<1x8x8xf32>
      %12 = vector.shape_cast %11 : vector<1x8x8xf32> to vector<8x8xf32>
      %13 = vector.shape_cast %10 : vector<8x8xf32> to vector<1x8x8xf32>
      tpu.vector_store %arg3[%c0_7, %c0_8, %c0_9], %13 {strides = array<i32>} : memref<1x8x8xf32, #tpu.memory_space<vmem>>, vector<1x8x8xf32>,
    } else {
    }
    return
  }
  func.func @transform_0(%arg0: i32, %arg1: i32) -> (i32, i32) {
    %c1_i32 = arith.constant 1 : i32
    %0 = arith.muli %arg0, %c1_i32 : i32
    %1 = arith.addi %0, %arg1 : i32
    %c0_i32 = arith.constant 0 : i32
    %2 = arith.minsi %1, %c0_i32 : i32
    %c0_i32_0 = arith.constant 0 : i32
    %c0_i32_1 = arith.constant 0 : i32
    return %c0_i32_0, %2 : i32, i32
  }
  func.func @transform_1(%arg0: i32, %arg1: i32) -> (i32, i32, i32) {
    %c0_i32 = arith.constant 0 : i32
    %c0_i32_0 = arith.constant 0 : i32
    %c0_i32_1 = arith.constant 0 : i32
    return %arg0, %c0_i32, %c0_i32_0 : i32, i32, i32
  }
}

</mosaic_0001>

<llo_original>
// kernel: gram_matrix.1
$region0: #{gram_matrix.1}
  #allocation0 [shape = 'u32[]', space=smem, size = 0x4, offset = 0x4, fixed_abs, tag = 'smem constant byte address 0x4 - core index']
  #allocation1 [shape = 'u32[144,128]{1,0:T(1,128)}', space=vmem, size = 0x12000, scoped, tag = 'internal scratch']
  %s0 = inlined_call_operand.vmem [shape: f32[8,256], index: 0, kind: input, shape index: {}]
  %s1 = inlined_call_operand.vmem [shape: f32[1,8,8], index: 1, kind: output, shape index: {}]
  %s2 = sld [smem:[#allocation0]]
  $region22: #{gram_matrix.1} parent=0
    _
  %s4 = ssub.s32 1, %s2
  %s5 = scalar_select 0, %s4, %s2
  // Predicated region
  $region2: #{gram_matrix.1} parent=0 // pred_check
    _
  $region3: #{gram_matrix.1} parent=0 // pred_check_branch
    %7 = sbr.rel (0) target = $region5
  $region4: #{gram_matrix.1} parent=0 // pred_region
    %s8 = sadd.s32 0, 0
    %p9 = scmp.lt.s32.totalorder %s8, 0
    %s10 = scalar_select %p9, %s8, 0
    %s11 = smul.u32 2, %s10
    %p12 = scmp.lt.s32.totalorder %s11, 1
    %s13 = scalar_select %p12, %s11, 1
    %s14 = smul.addr %s13, 8
    %s15 = scalar_lea.vmem %s0, %s14
    %s16 = sadd.s32 0, 0
    %p17 = scmp.lt.s32.totalorder %s16, 0
    %s18 = scalar_select %p17, %s16, 0
    %s19 = smul.u32 2, %s18
  $region5: #{gram_matrix.1} parent=0 // pred_fallthru
    _
  %s20 = sadd.s32 0, 0
  %p21 = scmp.lt.s32.totalorder %s20, 0
  %s22 = scalar_select %p21, %s20, 0
  %s23 = smul.u32 2, %s22
  %p24 = scmp.lt.s32.totalorder %s23, 1
  %s25 = scalar_select %p24, %s23, 1
  %s26 = smul.addr %s25, 8
  %s27 = scalar_lea.vmem %s0, %s26
  %s28 = sadd.s32 0, 0
  %p29 = scmp.lt.s32.totalorder %s28, 0
  %s30 = scalar_select %p29, %s28, 0
  %s31 = smul.u32 2, %s30
  %p32 = scmp.lt.s32.totalorder %s31, 1
  %s33 = scalar_select %p32, %s31, 1
  %s34 = smul.addr %s33, 8
  %s35 = scalar_lea.vmem %s0, %s34
  %s36 = sadd.s32 0, 0
  %p37 = scmp.lt.s32.totalorder %s36, 0
  %s38 = scalar_select %p37, %s36, 0
  %s39 = smul.u32 2, %s38
  %v40 = vld [vmem:[%s35] sm:$0xff]
  %v41 = vld [vmem:[%s35 + $0x8] sm:$0xff]
  %42 = vmatprep.subr.mxu0 %v41
  %43 = vmatpush1.xpose.msra.mxu0 %v40
  %44 = vmatprep.subr.mxu0 0.0
  %45 = vmatpush1.xpose.msra.mxu0 0.0
  %46 = vmatprep.subr.mxu0 0.0
  %47 = vmatpush1.xpose.msra.mxu0 0.0
  %48 = vmatprep.subr.mxu0 0.0
  %49 = vmatpush1.xpose.msra.mxu0 0.0
  %50 = vmatprep.subr.mxu0 0.0
  %51 = vmatpush1.xpose.msra.mxu0 0.0
  %52 = vmatprep.subr.mxu0 0.0
  %53 = vmatpush1.xpose.msra.mxu0 0.0
  %54 = vmatprep.subr.mxu0 0.0
  %55 = vmatpush1.xpose.msra.mxu0 0.0
  %56 = vmatprep.subr.mxu0 0.0
  %57 = vmatpush1.xpose.msra.mxu0 0.0
  %58 = vmatprep.subr.mxu0 0.0
  %59 = vmatpush1.xpose.msra.mxu0 0.0
  %60 = vmatprep.subr.mxu0 0.0
  %61 = vmatpush1.xpose.msra.mxu0 0.0
  %62 = vmatprep.subr.mxu0 0.0
  %63 = vmatpush1.xpose.msra.mxu0 0.0
  %64 = vmatprep.subr.mxu0 0.0
  %65 = vmatpush1.xpose.msra.mxu0 0.0
  %66 = vmatprep.subr.mxu0 0.0
  %67 = vmatpush1.xpose.msra.mxu0 0.0
  %68 = vmatprep.subr.mxu0 0.0
  %69 = vmatpush1.xpose.msra.mxu0 0.0
  %70 = vmatprep.subr.mxu0 0.0
  %71 = vmatpush1.xpose.msra.mxu0 0.0
  %72 = vmatprep.subr.mxu0 0.0
  %73 = vmatpush1.xpose.msra.mxu0 0.0
  %74 = vmatprep.subr.mxu0 0.0
  %75 = vmatpush1.xpose.msra.mxu0 0.0
  %76 = vmatprep.subr.mxu0 0.0
  %77 = vmatpush1.xpose.msra.mxu0 0.0
  %78 = vmatprep.subr.mxu0 0.0
  %79 = vmatpush1.xpose.msra.mxu0 0.0
  %80 = vmatprep.subr.mxu0 0.0
  %81 = vmatpush1.xpose.msra.mxu0 0.0
  %82 = vmatprep.subr.mxu0 0.0
  %83 = vmatpush1.xpose.msra.mxu0 0.0
  %84 = vmatprep.subr.mxu0 0.0
  %85 = vmatpush1.xpose.msra.mxu0 0.0
  %86 = vmatprep.subr.mxu0 0.0
  %87 = vmatpush1.xpose.msra.mxu0 0.0
  %88 = vmatprep.subr.mxu0 0.0
  %89 = vmatpush1.xpose.msra.mxu0 0.0
  %90 = vmatprep.subr.mxu0 0.0
  %91 = vmatpush1.xpose.msra.mxu0 0.0
  %92 = vmatprep.subr.mxu0 0.0
  %93 = vmatpush1.xpose.msra.mxu0 0.0
  %94 = vmatprep.subr.mxu0 0.0
  %95 = vmatpush1.xpose.msra.mxu0 0.0
  %96 = vmatprep.subr.mxu0 0.0
  %97 = vmatpush1.xpose.msra.mxu0 0.0
  %98 = vmatprep.subr.mxu0 0.0
  %99 = vmatpush1.xpose.msra.mxu0 0.0
  %100 = vmatprep.subr.mxu0 0.0
  %101 = vmatpush1.xpose.msra.mxu0 0.0
  %102 = vmatprep.subr.mxu0 0.0
  %103 = vmatpush1.xpose.msra.mxu0 0.0
  %104 = vmatprep.subr.mxu0 0.0
  %105 = vmatpush1.xpose.msra.mxu0 0.0
  %106 = vmatprep.mubr.f32.mxu0 %v41
  %107 = vmatmul.mubr.f32.gmra.mrb[0].mxu0 %v40
  %v108 = vpop.f32.mrb[0].mxu0
  %v109 = vadd.f32 0.0, %v108
  %v110 = vpop.f32.mrb[0].mxu0
  %111 = vdwg.mxu0
  %p112 = scmp.eq.s32.totalorder 0, 0
  // Predicated region
  $region6: #{gram_matrix.1} parent=0 // pred_check
    %p113 = pneg %p112
  $region7: #{gram_matrix.1} parent=0 // pred_check_branch
    %115 = sbr.rel (%p113) target = $region9
  $region8: #{gram_matrix.1} parent=0 // pred_region
    %vm116 = vcmask 64512
    %117 = vst.msk [vmem:[%s1] sm:$0xff] %vm116, %v109
  $region9: #{gram_matrix.1} parent=0 // pred_fallthru
    _
  %p118 = scmp.ne.s32.totalorder 0, 0
  // Predicated region
  $region10: #{gram_matrix.1} parent=0 // pred_check
    %p119 = pneg %p118
  $region11: #{gram_matrix.1} parent=0 // pred_check_branch
    %121 = sbr.rel (%p119) target = $region13
  $region12: #{gram_matrix.1} parent=0 // pred_region
    %v122 = vld [vmem:[%s1] sm:$0xff]
    %v123 = vadd.f32 %v122, %v109
    %vm124 = vcmask 64512
    %125 = vst.msk [vmem:[%s1] sm:$0xff] %vm124, %v123
  $region13: #{gram_matrix.1} parent=0 // pred_fallthru
    _
  // Predicated region
  $region14: #{gram_matrix.1} parent=0 // pred_check
    _
  $region15: #{gram_matrix.1} parent=0 // pred_check_branch
    %127 = sbr.rel (0) target = $region17
  $region16: #{gram_matrix.1} parent=0 // pred_region
    _
  $region17: #{gram_matrix.1} parent=0 // pred_fallthru
    _
  // Predicated region
  $region18: #{gram_matrix.1} parent=0 // pred_check
    _
  $region19: #{gram_matrix.1} parent=0 // pred_check_branch
    %129 = sbr.rel (0) target = $region21
  $region20: #{gram_matrix.1} parent=0 // pred_region
    _
  $region21: #{gram_matrix.1} parent=0 // pred_fallthru
    _

</llo_original>
